<compile_context>
chip_gen: v5e
topology: v5e:2x2
jax: 0.10.0
libtpu: 0.0.40
codegen_flags: <defaults>
</compile_context>

<pallas_src>
import jax
import jax.numpy as jnp
from jax.experimental import pallas as pl
from jax.experimental.pallas import tpu as pltpu

_MIB = 1024 * 1024


# ----------------------------------------------------------------------------- helpers
def _sublane_align(dtype):
    # native sublane packing: f32 -> 8, bf16 -> 16, int8/fp8 -> 32
    return max(8, 32 // jnp.dtype(dtype).itemsize)


def _pick_tile(dim, requested, align):
    """Largest t <= requested that divides dim and is a multiple of `align` (or t == dim)."""
    t = min(requested, dim)
    for cand in range(t, 0, -1):
        if dim % cand == 0 and (cand % align == 0 or cand == dim):
            return cand
    return dim


def _vmem_capacity_bytes():
    try:
        return int(pltpu.get_tpu_info().vmem_capacity_bytes)
    except Exception:
        return 64 * _MIB  # conservative: v7x per-TC VMEM


def _vmem_limit(est_bytes, cap_bytes):
    # 1.5x slack on the tile estimate, floor 32 MiB, ceiling ~90% of physical VMEM.
    return int(min(max(int(1.5 * est_bytes) + _MIB, 32 * _MIB), int(0.9 * cap_bytes)))


# ----------------------------------------------------------------------------- kernels
def _logits_lse_kernel(x_ref, w_ref, b_ref, logits_ref, lse_ref, m_ref, l_ref):
    """Per (row-tile, vocab-tile): raw logits streamed out + online logsumexp in scratch."""
    j = pl.program_id(1)
    nj = pl.num_programs(1)

    # Reset the running max / sum at the start of each row-tile's vocab sweep.
    @pl.when(j == 0)
    def _():
        m_ref[...] = jnp.full_like(m_ref, -jnp.inf)
        l_ref[...] = jnp.zeros_like(l_ref)

    # Logits tile on the MXU, accumulated in f32; softmax math stays f32.
    logits = jnp.dot(x_ref[...], w_ref[...], preferred_element_type=jnp.float32)
    logits = logits + b_ref[...].astype(jnp.float32)

    # Online logsumexp update (numerically stable across vocab tiles).
    # (If an entire tile were -inf, m_prev - m_new would be NaN; unreachable with real weights.)
    m_prev = m_ref[...]
    m_new = jnp.maximum(m_prev, jnp.max(logits, axis=-1, keepdims=True))
    l_ref[...] = l_ref[...] * jnp.exp(m_prev - m_new) + jnp.sum(
        jnp.exp(logits - m_new), axis=-1, keepdims=True
    )
    m_ref[...] = m_new

    # Streamed, full-block, lane-dense store of the raw logits (f32 intermediate).
    logits_ref[...] = logits

    # After the last vocab tile, emit this row-tile's logsumexp.
    @pl.when(j == nj - 1)
    def _():
        lse_ref[...] = m_ref[...] + jnp.log(l_ref[...])


def _normalize_kernel(logits_ref, lse_ref, o_ref):
    """out = logits - lse, subtracted in f32 then cast to the output dtype."""
    o_ref[...] = (logits_ref[...] - lse_ref[...]).astype(o_ref.dtype)


# ----------------------------------------------------------------------------- wrapper
def word_generator(x, weight, bias, *, tm=512, tv=1024,
                   out_dtype=jnp.float32, compute_dtype=jnp.bfloat16,
                   ensure_two_row_tiles=True, weight_buffers=2):
    """x: [N, d_model]; weight: [d_model, vocab]; bias: [vocab] -> [N, vocab] log-probs."""
    N, d_model = x.shape
    d_model_w, vocab = weight.shape
    assert d_model_w == d_model, "weight must be [d_model, vocab]"

    if compute_dtype is not None:
        x = x.astype(compute_dtype)
        weight = weight.astype(compute_dtype)
    b2d = bias.astype(jnp.float32).reshape(1, vocab)

    # Tile selection: clamp to problem extents, keep sublane/lane alignment, and try to
    # expose >= 2 row tiles so both v7x TensorCores get a share of the "parallel" axis.
    row_align = _sublane_align(x.dtype)
    tm = _pick_tile(N, tm, row_align)
    if ensure_two_row_tiles and N // tm < 2 and N // 2 >= row_align:
        tm = _pick_tile(N, N // 2, row_align)
    tv = _pick_tile(vocab, tv, 128)
    ni, nj = N // tm, vocab // tv
    assert N % tm == 0 and vocab % tv == 0

    in_bytes = jnp.dtype(x.dtype).itemsize
    out_bytes = jnp.dtype(out_dtype).itemsize
    cap = _vmem_capacity_bytes()

    # ---- pass 1: raw logits (streamed) + per-row logsumexp -------------------------------
    est1 = (2 * tm * d_model * in_bytes          # x tile (double-buffered)
            + max(2, weight_buffers) * d_model * tv * in_bytes   # weight tile(s)
            + 2 * 8 * tv * 4                     # bias tile (sublane-padded)
            + 2 * tm * tv * 4                    # streamed f32 logits output tile
            + 2 * tm * 128 * 4                   # lse output tile (lane-padded)
            + 2 * tm * 128 * 4)                  # m / l scratch (lane-padded)
    w_spec_kwargs = {} if weight_buffers == 2 else {"pipeline_mode": pl.Buffered(weight_buffers)}

    logits_raw, lse = pl.pallas_call(
        _logits_lse_kernel,
        out_shape=(jax.ShapeDtypeStruct((N, vocab), jnp.float32),
                   jax.ShapeDtypeStruct((N, 1), jnp.float32)),
        grid=(ni, nj),
        in_specs=[
            pl.BlockSpec((tm, d_model), lambda i, j: (i, 0)),
            pl.BlockSpec((d_model, tv), lambda i, j: (0, j), **w_spec_kwargs),
            pl.BlockSpec((1, tv), lambda i, j: (0, j)),
        ],
        out_specs=(
            pl.BlockSpec((tm, tv), lambda i, j: (i, j)),   # streamed logits
            pl.BlockSpec((tm, 1), lambda i, j: (i, 0)),    # lse, resident across vocab sweep
        ),
        scratch_shapes=[
            pltpu.VMEM((tm, 1), jnp.float32),   # running max
            pltpu.VMEM((tm, 1), jnp.float32),   # running sum of exp
        ],
        compiler_params=pltpu.CompilerParams(
            dimension_semantics=("parallel", "arbitrary"),
            vmem_limit_bytes=_vmem_limit(est1, cap),
        ),
    )(x, weight, b2d)

    # ---- pass 2: trivial streamed normalization (f32 subtract, then cast) ----------------
    est2 = 2 * tm * tv * 4 + 2 * tm * 128 * 4 + 2 * tm * tv * out_bytes
    out = pl.pallas_call(
        _normalize_kernel,
        out_shape=jax.ShapeDtypeStruct((N, vocab), out_dtype),
        grid=(ni, nj),
        in_specs=[
            pl.BlockSpec((tm, tv), lambda i, j: (i, j)),
            pl.BlockSpec((tm, 1), lambda i, j: (i, 0)),
        ],
        out_specs=pl.BlockSpec((tm, tv), lambda i, j: (i, j)),
        compiler_params=pltpu.CompilerParams(
            dimension_semantics=("parallel", "parallel"),
            vmem_limit_bytes=_vmem_limit(est2, cap),
        ),
    )(logits_raw, lse)
    return out


# ----------------------------------------------------------------------------- demo / check
if __name__ == "__main__":
    # Small shapes consistent with the module: batch=2, seq=8, d_model=32, vocab=256.
    batch, seq, d_model, vocab_size = 2, 8, 32, 256

    key = jax.random.PRNGKey(0)
    kx, kw, kb = jax.random.split(key, 3)

    x = jax.random.normal(kx, (batch, seq, d_model), dtype=jnp.float32)
    # PyTorch's nn.Linear stores weight as [vocab, d_model]; we keep the transposed
    # [d_model, vocab] layout for a lane-dense MXU matmul on TPU.
    w = jax.random.normal(kw, (d_model, vocab_size), dtype=jnp.float32) * 0.02
    b = jax.random.normal(kb, (vocab_size,), dtype=jnp.float32) * 0.02

    x_flat = x.reshape(batch * seq, d_model)
    ref = jax.nn.log_softmax(x_flat @ w + b, axis=-1)

    # 1) Production defaults: bf16 operands, streamed logits + lse, f32 normalization.
    out_default = word_generator(x_flat, w, b)
    # 2) f32 operands with tiny tiles -> exercises the multi-tile online-LSE path
    #    (2 row tiles x 2 vocab tiles) and allows a tight numerical check.
    out_f32 = word_generator(x_flat, w, b, tm=8, tv=128, compute_dtype=None)
    jax.block_until_ready((out_default, out_f32))

    assert jnp.allclose(out_f32, ref, atol=1e-5, rtol=1e-5), "mismatch (f32 small tiles)"
    assert jnp.allclose(out_default, ref, atol=2e-2, rtol=2e-2), "mismatch (bf16 defaults)"

    out = out_default.reshape(batch, seq, vocab_size)
    jax.block_until_ready(out)
    print("KERNEL_OK")
</pallas_src>

<mosaic_0001>
module attributes {stable_mosaic.version = 11 : i64} {
  func.func @_logits_lse_kernel(%arg0: i32, %arg1: i32, %arg2: memref<16x32xbf16, #tpu.memory_space<vmem>>, %arg3: memref<32x256xbf16, #tpu.memory_space<vmem>>, %arg4: memref<1x256xf32, #tpu.memory_space<vmem>>, %arg5: memref<16x256xf32, #tpu.memory_space<vmem>>, %arg6: memref<16x1xf32, #tpu.memory_space<vmem>>, %arg7: memref<16x1xf32, #tpu.memory_space<vmem>>, %arg8: memref<16x1xf32, #tpu.memory_space<vmem>>) attributes {dimension_semantics = [#tpu.dimension_semantics<parallel>, #tpu.dimension_semantics<arbitrary>], iteration_bounds = array<i64: 1, 1>, scalar_prefetch = 0 : i64, scratch_operands = 2 : i64, tpu.core_type = #tpu.core_type<tc>, window_params = [{transform_indices = @transform_0, window_bounds = array<i64: 16, 32>}, {transform_indices = @transform_1, window_bounds = array<i64: 32, 256>}, {transform_indices = @transform_2, window_bounds = array<i64: 1, 256>}, {transform_indices = @transform_3, window_bounds = array<i64: 16, 256>}, {transform_indices = @transform_4, window_bounds = array<i64: 16, 1>}]} {
    %c0_i32 = arith.constant 0 : i32
    %0 = arith.cmpi eq, %arg1, %c0_i32 : i32
    %1 = arith.extui %0 : i1 to i32
    %c0_i32_0 = arith.constant 0 : i32
    %2 = arith.cmpi ne, %1, %c0_i32_0 : i32
    scf.if %2 {
      %cst_20 = arith.constant 0xFF800000 : f32
      %29 = vector.broadcast %cst_20 : f32 to vector<16x1xf32>
      %c0_21 = arith.constant 0 : index
      %c0_22 = arith.constant 0 : index
      %30 = vector.load %arg7[%c0_21, %c0_22] : memref<16x1xf32, #tpu.memory_space<vmem>>, vector<16x1xf32>
      tpu.vector_store %arg7[%c0_21, %c0_22], %29 {strides = array<i32>} : memref<16x1xf32, #tpu.memory_space<vmem>>, vector<16x1xf32>,
      %cst_23 = arith.constant 0.000000e+00 : f32
      %31 = vector.broadcast %cst_23 : f32 to vector<16x1xf32>
      %c0_24 = arith.constant 0 : index
      %c0_25 = arith.constant 0 : index
      %32 = vector.load %arg8[%c0_24, %c0_25] : memref<16x1xf32, #tpu.memory_space<vmem>>, vector<16x1xf32>
      tpu.vector_store %arg8[%c0_24, %c0_25], %31 {strides = array<i32>} : memref<16x1xf32, #tpu.memory_space<vmem>>, vector<16x1xf32>,
    } else {
    }
    %c0 = arith.constant 0 : index
    %c0_1 = arith.constant 0 : index
    %3 = vector.load %arg2[%c0, %c0_1] : memref<16x32xbf16, #tpu.memory_space<vmem>>, vector<16x32xbf16>
    %c0_2 = arith.constant 0 : index
    %c0_3 = arith.constant 0 : index
    %4 = vector.load %arg3[%c0_2, %c0_3] : memref<32x256xbf16, #tpu.memory_space<vmem>>, vector<32x256xbf16>
    %cst = arith.constant dense<0.000000e+00> : vector<16x256xf32>
    %5 = tpu.matmul %3, %4, %cst {dimension_numbers = #tpu.dot_dimension_numbers<[1], [0], [0], [1], [0, 0, 1, 1], [], []>} : vector<16x32xbf16>, vector<32x256xbf16>, vector<16x256xf32> -> vector<16x256xf32>
    %c0_4 = arith.constant 0 : index
    %c0_5 = arith.constant 0 : index
    %6 = vector.load %arg4[%c0_4, %c0_5] : memref<1x256xf32, #tpu.memory_space<vmem>>, vector<1x256xf32>
    %7 = vector.broadcast %6 : vector<1x256xf32> to vector<16x256xf32>
    %8 = arith.addf %5, %7 : vector<16x256xf32>
    %c0_6 = arith.constant 0 : index
    %c0_7 = arith.constant 0 : index
    %9 = vector.load %arg7[%c0_6, %c0_7] : memref<16x1xf32, #tpu.memory_space<vmem>>, vector<16x1xf32>
    %cst_8 = arith.constant dense<0xFF800000> : vector<16xf32>
    %10 = vector.multi_reduction <maximumf>, %8, %cst_8 [1] : vector<16x256xf32> to vector<16xf32>
    %11 = vector.shape_cast %10 : vector<16xf32> to vector<16x1xf32>
    %12 = arith.maximumf %9, %11 : vector<16x1xf32>
    %c0_9 = arith.constant 0 : index
    %c0_10 = arith.constant 0 : index
    %13 = vector.load %arg8[%c0_9, %c0_10] : memref<16x1xf32, #tpu.memory_space<vmem>>, vector<16x1xf32>
    %14 = arith.subf %9, %12 : vector<16x1xf32>
    %15 = math.exp %14 : vector<16x1xf32>
    %16 = arith.mulf %13, %15 : vector<16x1xf32>
    %17 = vector.broadcast %12 : vector<16x1xf32> to vector<16x256xf32>
    %18 = arith.subf %8, %17 : vector<16x256xf32>
    %19 = math.exp %18 : vector<16x256xf32>
    %cst_11 = arith.constant dense<0.000000e+00> : vector<16xf32>
    %20 = vector.multi_reduction <add>, %19, %cst_11 [1] : vector<16x256xf32> to vector<16xf32>
    %21 = vector.shape_cast %20 : vector<16xf32> to vector<16x1xf32>
    %22 = arith.addf %16, %21 : vector<16x1xf32>
    %c0_12 = arith.constant 0 : index
    %c0_13 = arith.constant 0 : index
    %23 = vector.load %arg8[%c0_12, %c0_13] : memref<16x1xf32, #tpu.memory_space<vmem>>, vector<16x1xf32>
    tpu.vector_store %arg8[%c0_12, %c0_13], %22 {strides = array<i32>} : memref<16x1xf32, #tpu.memory_space<vmem>>, vector<16x1xf32>,
    %c0_14 = arith.constant 0 : index
    %c0_15 = arith.constant 0 : index
    %24 = vector.load %arg7[%c0_14, %c0_15] : memref<16x1xf32, #tpu.memory_space<vmem>>, vector<16x1xf32>
    tpu.vector_store %arg7[%c0_14, %c0_15], %12 {strides = array<i32>} : memref<16x1xf32, #tpu.memory_space<vmem>>, vector<16x1xf32>,
    %c0_16 = arith.constant 0 : index
    %c0_17 = arith.constant 0 : index
    %25 = vector.load %arg5[%c0_16, %c0_17] : memref<16x256xf32, #tpu.memory_space<vmem>>, vector<16x256xf32>
    tpu.vector_store %arg5[%c0_16, %c0_17], %8 {strides = array<i32>} : memref<16x256xf32, #tpu.memory_space<vmem>>, vector<16x256xf32>,
    %c0_i32_18 = arith.constant 0 : i32
    %26 = arith.cmpi eq, %arg1, %c0_i32_18 : i32
    %27 = arith.extui %26 : i1 to i32
    %c0_i32_19 = arith.constant 0 : i32
    %28 = arith.cmpi ne, %27, %c0_i32_19 : i32
    scf.if %28 {
      %c0_20 = arith.constant 0 : index
      %c0_21 = arith.constant 0 : index
      %29 = vector.load %arg7[%c0_20, %c0_21] : memref<16x1xf32, #tpu.memory_space<vmem>>, vector<16x1xf32>
      %c0_22 = arith.constant 0 : index
      %c0_23 = arith.constant 0 : index
      %30 = vector.load %arg8[%c0_22, %c0_23] : memref<16x1xf32, #tpu.memory_space<vmem>>, vector<16x1xf32>
      %31 = math.log %30 : vector<16x1xf32>
      %32 = arith.addf %29, %31 : vector<16x1xf32>
      %c0_24 = arith.constant 0 : index
      %c0_25 = arith.constant 0 : index
      %33 = vector.load %arg6[%c0_24, %c0_25] : memref<16x1xf32, #tpu.memory_space<vmem>>, vector<16x1xf32>
      tpu.vector_store %arg6[%c0_24, %c0_25], %32 {strides = array<i32>} : memref<16x1xf32, #tpu.memory_space<vmem>>, vector<16x1xf32>,
    } else {
    }
    return
  }
  func.func @transform_0(%arg0: i32, %arg1: i32) -> (i32, i32) {
    %c0_i32 = arith.constant 0 : i32
    %c0_i32_0 = arith.constant 0 : i32
    return %arg0, %c0_i32 : i32, i32
  }
  func.func @transform_1(%arg0: i32, %arg1: i32) -> (i32, i32) {
    %c0_i32 = arith.constant 0 : i32
    %c0_i32_0 = arith.constant 0 : i32
    return %c0_i32, %arg1 : i32, i32
  }
  func.func @transform_2(%arg0: i32, %arg1: i32) -> (i32, i32) {
    %c0_i32 = arith.constant 0 : i32
    %c0_i32_0 = arith.constant 0 : i32
    return %c0_i32, %arg1 : i32, i32
  }
  func.func @transform_3(%arg0: i32, %arg1: i32) -> (i32, i32) {
    %c0_i32 = arith.constant 0 : i32
    return %arg0, %arg1 : i32, i32
  }
  func.func @transform_4(%arg0: i32, %arg1: i32) -> (i32, i32) {
    %c0_i32 = arith.constant 0 : i32
    %c0_i32_0 = arith.constant 0 : i32
    return %arg0, %c0_i32 : i32, i32
  }
}

</mosaic_0001>

<llo_original>
// kernel: tpu_custom_call.1
$region0: #{tpu_custom_call.1}
  #allocation0 [shape = 'u32[]', space=smem, size = 0x4, offset = 0x4, fixed_abs, tag = 'smem constant byte address 0x4 - core index']
  #allocation1 [shape = 'u32[72,128]{1,0:T(1,128)}', space=vmem, size = 0x9000, scoped, tag = 'internal scratch']
  #allocation2 [shape = 'f32[16,1]{1,0:T(8,128)}', space=vmem, size = 0x2000, scoped, tag = 'scratch operand']
  #allocation3 [shape = 'f32[16,1]{1,0:T(8,128)}', space=vmem, size = 0x2000, scoped, tag = 'scratch operand']
  %s0 = inlined_call_operand.hbm [shape: bf16[16,32], index: 0, kind: input, shape index: {}]
  %s1 = inlined_call_operand.hbm [shape: bf16[32,256], index: 1, kind: input, shape index: {}]
  %s2 = inlined_call_operand.hbm [shape: f32[1,256], index: 2, kind: input, shape index: {}]
  %s3 = inlined_call_operand.hbm [shape: f32[16,256], index: 3, kind: output, shape index: {0}]
  %s4 = inlined_call_operand.vmem [shape: f32[16,1], index: 4, kind: output, shape index: {1}]
  %5 = xla_tuple %s3, %s4
  %s6 = sld [smem:[#allocation0]]
  $region50: #{tpu_custom_call.1} parent=0
    _
  %s8 = ssub.s32 1, %s6
  %s9 = scalar_select 0, %s8, %s6
  $region1: #{tpu_custom_call.1} parent=0
    #allocation4 [shape = 'u8[4096]{0}', space=vmem, size = 0x1000, scoped, tag = 'input window, operand 0, single buffered']
    #allocation5 [shape = 's32[1]{0}', space=sflag, size = 0x4, scoped, tag = 'scoped memory for tpu_custom_call.1']
    #allocation6 [shape = 's32[1]{0}', space=sflag, size = 0x4, scoped, tag = 'scoped memory for tpu_custom_call.1']
    #allocation7 [shape = 'u8[16384]{0}', space=vmem, size = 0x4000, scoped, tag = 'input window, operand 1, single buffered']
    #allocation8 [shape = 's32[1]{0}', space=sflag, size = 0x4, scoped, tag = 'scoped memory for tpu_custom_call.1']
    #allocation9 [shape = 'u8[1024]{0}', space=vmem, size = 0x400, scoped, tag = 'input window, operand 2, single buffered']
    #allocation10 [shape = 'u8[16384]{0}', space=vmem, size = 0x4000, scoped, tag = 'output window, operand 0, single buffered']
    %10 = vsyncpa [#allocation5], 0
    %11 = vsyncpa [#allocation8], 0
    %12 = vsyncpa [#allocation6], 0
    // Predicated region
    $region2: #{tpu_custom_call.1} parent=1 // pred_check
      _
    $region3: #{tpu_custom_call.1} parent=1 // pred_check_branch
      %14 = sbr.rel (0) target = $region5
    $region4: #{tpu_custom_call.1} parent=1 // pred_region
      %16 = vsyncadd [#allocation5], 0
      %s17 = sshll.u32 %s0, 4
      %s18 = int_to_ptr.hbm [resolvable:$true] %s17
      %s19 = sshll.u32 [#allocation4], 4
      %s20 = int_to_ptr.vmem [resolvable:$true] %s19
      %25 = dma.hbm_to_vmem [thread:$0]  %s18, 128, %s20, [#allocation5], 64, 64, 4
    $region5: #{tpu_custom_call.1} parent=1 // pred_fallthru
      _
    // Predicated region
    $region6: #{tpu_custom_call.1} parent=1 // pred_check
      _
    $region7: #{tpu_custom_call.1} parent=1 // pred_check_branch
      %27 = sbr.rel (0) target = $region9
    $region8: #{tpu_custom_call.1} parent=1 // pred_region
      %29 = vsyncadd [#allocation8], 0
      %s30 = sshll.u32 %s1, 4
      %s31 = int_to_ptr.hbm [resolvable:$true] %s30
      %s32 = sshll.u32 [#allocation7], 4
      %s33 = int_to_ptr.vmem [resolvable:$true] %s32
      %38 = dma.hbm_to_vmem [thread:$0]  %s31, 512, %s33, [#allocation8], 128, 128, 8
    $region9: #{tpu_custom_call.1} parent=1 // pred_fallthru
      _
    // Predicated region
    $region10: #{tpu_custom_call.1} parent=1 // pred_check
      _
    $region11: #{tpu_custom_call.1} parent=1 // pred_check_branch
      %40 = sbr.rel (0) target = $region13
    $region12: #{tpu_custom_call.1} parent=1 // pred_region
      %42 = vsyncadd [#allocation8], 0
      %s44 = sshll.u32 %s2, 4
      %s45 = int_to_ptr.hbm [resolvable:$true] %s44
      %s46 = sshll.u32 [#allocation9], 4
      %s47 = int_to_ptr.vmem [resolvable:$true] %s46
      %49 = dma.hbm_to_vmem [thread:$0]  %s45, 32, %s47, [#allocation8]
    $region13: #{tpu_custom_call.1} parent=1 // pred_fallthru
      _
    // Predicated region
    $region14: #{tpu_custom_call.1} parent=1 // pred_check
      _
    $region15: #{tpu_custom_call.1} parent=1 // pred_check_branch
      %51 = sbr.rel (0) target = $region17
    $region16: #{tpu_custom_call.1} parent=1 // pred_region
      %53 = dma.done [#allocation5], 128
    $region17: #{tpu_custom_call.1} parent=1 // pred_fallthru
      _
    // Predicated region
    $region18: #{tpu_custom_call.1} parent=1 // pred_check
      _
    $region19: #{tpu_custom_call.1} parent=1 // pred_check_branch
      %55 = sbr.rel (0) target = $region21
    $region20: #{tpu_custom_call.1} parent=1 // pred_region
      %57 = dma.done [#allocation8], 512
    $region21: #{tpu_custom_call.1} parent=1 // pred_fallthru
      _
    // Predicated region
    $region22: #{tpu_custom_call.1} parent=1 // pred_check
      _
    $region23: #{tpu_custom_call.1} parent=1 // pred_check_branch
      %59 = sbr.rel (0) target = $region25
    $region24: #{tpu_custom_call.1} parent=1 // pred_region
      %61 = dma.done [#allocation8], 32
    $region25: #{tpu_custom_call.1} parent=1 // pred_fallthru
      _
    %p63 = scmp.eq.s32.totalorder 0, 0
    // Predicated region
    $region26: #{tpu_custom_call.1} parent=1 // pred_check
      %p64 = pneg %p63
    $region27: #{tpu_custom_call.1} parent=1 // pred_check_branch
      %66 = sbr.rel (%p64) target = $region29
    $region28: #{tpu_custom_call.1} parent=1 // pred_region
      %vm67 = vcmask 7168
      %68 = vst.msk [vmem:[#allocation2] sm:$0xff] %vm67, -inf
      %69 = vst.msk [vmem:[#allocation2 + $0x8] sm:$0xff] %vm67, -inf
      %70 = vst.msk [vmem:[#allocation3] sm:$0xff] %vm67, 0.0
      %71 = vst.msk [vmem:[#allocation3 + $0x8] sm:$0xff] %vm67, 0.0
    $region29: #{tpu_custom_call.1} parent=1 // pred_fallthru
      _
    %v72 = vld [vmem:[#allocation4] sm:$0xf]
    %v73 = vld [vmem:[#allocation4 + $0x4] sm:$0xf]
    %v74 = vld [vmem:[#allocation7] sm:$0xff]
    %v75 = vld [vmem:[#allocation7 + $0x8] sm:$0xff]
    %v76 = vld [vmem:[#allocation7 + $0x10] sm:$0xff]
    %v77 = vld [vmem:[#allocation7 + $0x18] sm:$0xff]
    %v78 = vld [vmem:[#allocation9] sm:$0x3]
    %v80 = vperm.slane %v78, 0
    %v81 = vperm.slane %v78, 1
    %v86 = vunpack.c.l.b16 %v72
    %v87 = vunpack.c.l.b16 %v73
    %v88 = vpack.c.b16 %v87, %v86
    %v93 = vunpack.c.l.b16 %v74
    %v94 = vunpack.c.h.b16 %v74
    %v95 = vunpack.c.l.b16 %v75
    %v96 = vunpack.c.h.b16 %v75
    %v97 = vunpack.c.l.b16 %v76
    %v98 = vunpack.c.h.b16 %v76
    %v99 = vunpack.c.l.b16 %v77
    %v100 = vunpack.c.h.b16 %v77
    %v101 = vpack.c.b16 %v95, %v93
    %v102 = vpack.c.b16 %v96, %v94
    %v103 = vpack.c.b16 %v99, %v97
    %v104 = vpack.c.b16 %v100, %v98
    %vm109 = vcmask 261120
    %v111 = vsel %vm109, %v88, 0
    %113 = vmatpush.bf16.msra.mxu0 0
    %114 = vmatpush.bf16.msra.mxu0 0
    %115 = vmatpush.bf16.msra.mxu0 0
    %116 = vmatpush.bf16.msra.mxu0 0
    %117 = vmatpush.bf16.msra.mxu0 0
    %118 = vmatpush.bf16.msra.mxu0 0
    %119 = vmatpush.bf16.msra.mxu0 %v103
    %120 = vmatpush.bf16.msra.mxu0 %v101
    %121 = vmatmul.bf16.gmra.mxu0 %v111
    %v122 = vpop.f32.mrf.mxu0
    %v123 = vadd.f32 %v80, %v122
    %v124 = vpop.f32.mrf.mxu0
    %v125 = vadd.f32 %v80, %v124
    %126 = vdwg.mxu0
    %127 = vmatpush.bf16.msra.mxu0 0
    %128 = vmatpush.bf16.msra.mxu0 0
    %129 = vmatpush.bf16.msra.mxu0 0
    %130 = vmatpush.bf16.msra.mxu0 0
    %131 = vmatpush.bf16.msra.mxu0 0
    %132 = vmatpush.bf16.msra.mxu0 0
    %133 = vmatpush.bf16.msra.mxu0 %v104
    %134 = vmatpush.bf16.msra.mxu0 %v102
    %135 = vmatmul.bf16.gmra.mxu0 %v111
    %v136 = vpop.f32.mrf.mxu0
    %v137 = vadd.f32 %v81, %v136
    %v138 = vpop.f32.mrf.mxu0
    %v139 = vadd.f32 %v81, %v138
    %140 = vdwg.mxu0
    %v141 = vld [vmem:[#allocation2] sm:$0xff]
    %v142 = vld [vmem:[#allocation2 + $0x8] sm:$0xff]
    %v143 = vmax.f32 %v123, %v137
    %144 = vmax.xlane.f32.xlu0 %v143
    %v145 = vpop.xlane.xlu0 %144
    %v146 = vmax.f32 %v125, %v139
    %147 = vmax.xlane.f32.xlu0 %v146
    %v148 = vpop.xlane.xlu0 %147
    %v149 = vmax.f32 %v141, %v145
    %v150 = vmax.f32 %v142, %v148
    %v151 = vld [vmem:[#allocation3] sm:$0xff]
    %v152 = vld [vmem:[#allocation3 + $0x8] sm:$0xff]
    %v153 = vsub.f32 %v141, %v149
    %v154 = vsub.f32 %v142, %v150
    %v155 = vmul.f32 %v153, 1.442695
    %v156 = vpow.pop %v155
    %v157 = vmul.f32 %v154, 1.442695
    %v158 = vpow.pop %v157
    %v159 = vmul.f32 %v151, %v156
    %v160 = vmul.f32 %v152, %v158
    %162 = vset.pattern.permute.xlu0 0
    %163 = vperm.xlu0 %162, %v149
    %v164 = vpop.permute.xlu0 %163
    %167 = vset.pattern.permute.xlu0 0
    %168 = vperm.xlu0 %167, %v150
    %v169 = vpop.permute.xlu0 %168
    %v171 = vsub.f32 %v123, %v164
    %v172 = vsub.f32 %v137, %v164
    %v173 = vsub.f32 %v125, %v169
    %v174 = vsub.f32 %v139, %v169
    %v175 = vmul.f32 %v171, 1.442695
    %v176 = vpow.pop %v175
    %v177 = vmul.f32 %v172, 1.442695
    %v178 = vpow.pop %v177
    %v179 = vmul.f32 %v173, 1.442695
    %v180 = vpow.pop %v179
    %v181 = vmul.f32 %v174, 1.442695
    %v182 = vpow.pop %v181
    %v183 = vadd.f32 %v176, %v178
    %184 = vadd.xlane.f32.xlu0 %v183
    %v185 = vpop.xlane.xlu0 %184
    %v186 = vadd.f32 %v180, %v182
    %187 = vadd.xlane.f32.xlu0 %v186
    %v188 = vpop.xlane.xlu0 %187
    %v189 = vadd.f32 %v159, %v185
    %v190 = vadd.f32 %v160, %v188
    %vm191 = vcmask 7168
    %192 = vst.msk [vmem:[#allocation3] sm:$0xff] %vm191, %v189
    %193 = vst.msk [vmem:[#allocation3 + $0x8] sm:$0xff] %vm191, %v190
    %194 = vst.msk [vmem:[#allocation2] sm:$0xff] %vm191, %v149
    %195 = vst.msk [vmem:[#allocation2 + $0x8] sm:$0xff] %vm191, %v150
    %196 = vst [vmem:[#allocation10] sm:$0xff] %v123
    %197 = vst [vmem:[#allocation10 + $0x8] sm:$0xff] %v137
    %198 = vst [vmem:[#allocation10 + $0x10] sm:$0xff] %v125
    %199 = vst [vmem:[#allocation10 + $0x18] sm:$0xff] %v139
    // Predicated region
    $region30: #{tpu_custom_call.1} parent=1 // pred_check
      %p200 = pneg %p63
    $region31: #{tpu_custom_call.1} parent=1 // pred_check_branch
      %202 = sbr.rel (%p200) target = $region33
    $region32: #{tpu_custom_call.1} parent=1 // pred_region
      %v203 = vld [vmem:[#allocation2] sm:$0xff]
      %v204 = vld [vmem:[#allocation2 + $0x8] sm:$0xff]
      %v205 = vld [vmem:[#allocation3] sm:$0xff]
      %v206 = vld [vmem:[#allocation3 + $0x8] sm:$0xff]
      %v207 = vlog2.pop %v205
      %v208 = vmul.f32 %v207, 0.6931472
      %v209 = vlog2.pop %v206
      %v210 = vmul.f32 %v209, 0.6931472
      %v211 = vadd.f32 %v203, %v208
      %v212 = vadd.f32 %v204, %v210
      %213 = vst.msk [vmem:[%s4] sm:$0xff] %vm191, %v211
      %214 = vst.msk [vmem:[%s4 + $0x8] sm:$0xff] %vm191, %v212
    $region33: #{tpu_custom_call.1} parent=1 // pred_fallthru
      _
    // Predicated region
    $region34: #{tpu_custom_call.1} parent=1 // pred_check
      _
    $region35: #{tpu_custom_call.1} parent=1 // pred_check_branch
      %216 = sbr.rel (0) target = $region37
    $region36: #{tpu_custom_call.1} parent=1 // pred_region
      %218 = vsyncadd [#allocation6], 0
      %s219 = sshll.u32 [#allocation10], 4
      %s220 = int_to_ptr.vmem [resolvable:$true] %s219
      %s221 = sshll.u32 %s3, 4
      %s222 = int_to_ptr.hbm [resolvable:$true] %s221
      %227 = dma.vmem_to_hbm [thread:$0]  %s220, 512, %s222, [#allocation6], 256, 256, 16
    $region37: #{tpu_custom_call.1} parent=1 // pred_fallthru
      _
    // Predicated region
    $region38: #{tpu_custom_call.1} parent=1 // pred_check
      _
    $region39: #{tpu_custom_call.1} parent=1 // pred_check_branch
      %229 = sbr.rel (0) target = $region41
    $region40: #{tpu_custom_call.1} parent=1 // pred_region
      _
    $region41: #{tpu_custom_call.1} parent=1 // pred_fallthru
      _
    // Predicated region
    $region42: #{tpu_custom_call.1} parent=1 // pred_check
      _
    $region43: #{tpu_custom_call.1} parent=1 // pred_check_branch
      %231 = sbr.rel (0) target = $region45
    $region44: #{tpu_custom_call.1} parent=1 // pred_region
      %233 = dma.done [#allocation6], 512
    $region45: #{tpu_custom_call.1} parent=1 // pred_fallthru
      _
    // Predicated region
    $region46: #{tpu_custom_call.1} parent=1 // pred_check
      _
    $region47: #{tpu_custom_call.1} parent=1 // pred_check_branch
      %235 = sbr.rel (0) target = $region49
    $region48: #{tpu_custom_call.1} parent=1 // pred_region
      _
    $region49: #{tpu_custom_call.1} parent=1 // pred_fallthru
      _
    %236 = vsyncpa [#allocation5], 1
    %237 = vsyncpa [#allocation8], 1
    %238 = vsyncpa [#allocation6], 1

</llo_original>
